<compile_context>
chip_gen: v6e
topology: v6e:2x2x1
jax: 0.10.0
libtpu: 0.0.40
codegen_flags: <defaults>
</compile_context>

<pallas_src>
import math

import numpy as np
import jax
import jax.numpy as jnp
from jax.experimental import pallas as pl
from jax.experimental.pallas import tpu as pltpu

# module_cfg (synthetic, small)
C_S = 64              # c_s
C_POS_EMB = 32        # c_pos_emb
C_TIMESTEP_EMB = 16   # c_timestep_emb
EMBED_CHAIN = False   # cfg.embed_chain
MAX_LEN = 2056        # get_index_embedding max_len
MAX_POSITIONS = 2056  # get_time_embedding max_positions (embed_t)

B = 2
NUM_RES = 16

K_FEAT = C_POS_EMB + 2 * C_TIMESTEP_EMB   # 64 sin/cos feature columns
N_PACK = 8                                # packed per-residue input lanes


def _node_feature_kernel(packed_ref, freq_ref, w_feat_ref, w_dm_ref, bias_ref,
                         out_ref):
    rows = out_ref.shape[0]                      # B * NUM_RES

    packed = packed_ref[...]                     # (rows, N_PACK)
    pos = packed[:, 0:1]                         # (rows, 1)
    mask = packed[:, 1:2]                        # res_mask
    dm = packed[:, 2:3]                          # diffuse_mask
    so3 = packed[:, 3:4]                         # so3_t broadcast per residue
    r3 = packed[:, 4:5]                          # r3_t  broadcast per residue

    lane = jax.lax.broadcasted_iota(jnp.int32, (rows, K_FEAT), 1)

    # Base value per feature column:
    #   cols [0, 32)  -> pos        (index embedding)
    #   cols [32, 48) -> so3_t      (time embedding)
    #   cols [48, 64) -> r3_t       (time embedding)
    base = jnp.where(
        lane < C_POS_EMB, pos,
        jnp.where(lane < C_POS_EMB + C_TIMESTEP_EMB, so3, r3))

    ang = base * freq_ref[...]                   # (rows, K_FEAT)

    half_pos = C_POS_EMB // 2
    half_ts = C_TIMESTEP_EMB // 2
    is_sin = ((lane < half_pos)
              | ((lane >= C_POS_EMB) & (lane < C_POS_EMB + half_ts))
              | ((lane >= C_POS_EMB + C_TIMESTEP_EMB)
                 & (lane < C_POS_EMB + C_TIMESTEP_EMB + half_ts)))

    # pos_emb, t_so3, t_r3 are all multiplied by res_mask in the reference.
    feat = jnp.where(is_sin, jnp.sin(ang), jnp.cos(ang)) * mask   # (rows, 64)

    out = jnp.dot(feat, w_feat_ref[...], preferred_element_type=jnp.float32)
    out = out + dm * w_dm_ref[...]               # diffuse_mask column (unmasked)
    out = out + bias_ref[...]
    out_ref[...] = out.astype(out_ref.dtype)


def _freq_row():
    """Per-column frequencies for the fused (rows, 64) angle computation."""
    k = np.arange(C_POS_EMB // 2, dtype=np.float64)
    freq_pos = np.pi / (MAX_LEN ** (2.0 * k / C_POS_EMB))          # 16 values
    half_ts = C_TIMESTEP_EMB // 2
    j = np.arange(half_ts, dtype=np.float64)
    freq_ts = MAX_POSITIONS * np.exp(
        -j * (math.log(MAX_POSITIONS) / (half_ts - 1)))            # 8 values
    row = np.concatenate(
        [freq_pos, freq_pos,           # pos_emb: sin half, cos half
         freq_ts, freq_ts,             # so3 time emb: sin half, cos half
         freq_ts, freq_ts])            # r3  time emb: sin half, cos half
    return jnp.asarray(row, dtype=jnp.float32)[None, :]            # (1, 64)


def node_feature_net(so3_t, r3_t, res_mask, diffuse_mask, pos, params):
    """so3_t/r3_t: (B, 1); res_mask/diffuse_mask/pos: (B, N). Returns (B, N, C_S)."""
    w_feat, w_dm, bias = params
    b, n = res_mask.shape
    rows = b * n

    so3_b = jnp.broadcast_to(so3_t[:, :1].astype(jnp.float32), (b, n))
    r3_b = jnp.broadcast_to(r3_t[:, :1].astype(jnp.float32), (b, n))
    zeros = jnp.zeros((b, n), jnp.float32)
    packed = jnp.stack(
        [pos.astype(jnp.float32),
         res_mask.astype(jnp.float32),
         diffuse_mask.astype(jnp.float32),
         so3_b, r3_b, zeros, zeros, zeros],
        axis=-1).reshape(rows, N_PACK)

    freq = _freq_row()

    out = pl.pallas_call(
        _node_feature_kernel,
        out_shape=jax.ShapeDtypeStruct((rows, C_S), jnp.float32),
        grid_spec=pl.GridSpec(
            grid=(1,),
            in_specs=[
                pl.BlockSpec((rows, N_PACK), lambda i: (0, 0)),   # packed inputs
                pl.BlockSpec((1, K_FEAT), lambda i: (0, 0)),      # freq row
                pl.BlockSpec((K_FEAT, C_S), lambda i: (0, 0)),    # fused weight
                pl.BlockSpec((1, C_S), lambda i: (0, 0)),         # diffuse_mask weight row
                pl.BlockSpec((1, C_S), lambda i: (0, 0)),         # bias
            ],
            out_specs=pl.BlockSpec((rows, C_S), lambda i: (0, 0)),
        ),
        compiler_params=pltpu.CompilerParams(
            dimension_semantics=("arbitrary",)),
    )(packed, freq, w_feat, w_dm, bias)

    return out.reshape(b, n, C_S)


# ---------------- pure-JAX reference (mirrors the PyTorch module) ----------------
def _get_index_embedding_ref(indices, embed_size, max_len):
    k = jnp.arange(embed_size // 2, dtype=jnp.float32)
    ang = indices[..., None] * math.pi / (max_len ** (2.0 * k / embed_size))
    return jnp.concatenate([jnp.sin(ang), jnp.cos(ang)], axis=-1)


def _get_time_embedding_ref(timesteps, embedding_dim, max_positions):
    timesteps = timesteps * max_positions
    half = embedding_dim // 2
    scale = math.log(max_positions) / (half - 1)
    freqs = jnp.exp(jnp.arange(half, dtype=jnp.float32) * -scale)
    emb = timesteps[:, None] * freqs[None, :]
    return jnp.concatenate([jnp.sin(emb), jnp.cos(emb)], axis=-1)


def node_feature_net_ref(so3_t, r3_t, res_mask, diffuse_mask, pos, W, bias):
    n = res_mask.shape[1]
    pos_emb = _get_index_embedding_ref(pos.astype(jnp.float32), C_POS_EMB, MAX_LEN)
    pos_emb = pos_emb * res_mask[..., None]

    def embed_t(t):
        te = _get_time_embedding_ref(t[:, 0], C_TIMESTEP_EMB, MAX_POSITIONS)
        te = jnp.repeat(te[:, None, :], n, axis=1)
        return te * res_mask[..., None]

    feats = jnp.concatenate(
        [pos_emb, diffuse_mask[..., None], embed_t(so3_t), embed_t(r3_t)], axis=-1)
    return feats @ W + bias


if __name__ == "__main__":
    key = jax.random.PRNGKey(0)
    k1, k2, k3, k4, k5, k6 = jax.random.split(key, 6)

    embed_size = C_POS_EMB + 2 * C_TIMESTEP_EMB + 1  # embed_chain=False -> 65
    # Deterministic synthetic Linear parameters, stored as (in, out).
    scale = 1.0 / math.sqrt(embed_size)
    W_full = jax.random.uniform(k1, (embed_size, C_S), jnp.float32, -scale, scale)
    bias_row = jax.random.uniform(k2, (1, C_S), jnp.float32, -scale, scale)

    # Fused weight: rows for [pos_emb(32) | t_so3(16) | t_r3(16)]; dm row separate.
    w_feat = jnp.concatenate([W_full[:C_POS_EMB], W_full[C_POS_EMB + 1:]], axis=0)
    w_dm = W_full[C_POS_EMB:C_POS_EMB + 1]
    params = (w_feat, w_dm, bias_row)

    # Example inputs
    so3_t = jax.random.uniform(k3, (B, 1), jnp.float32)
    r3_t = jax.random.uniform(k4, (B, 1), jnp.float32)
    res_mask = (jax.random.uniform(k5, (B, NUM_RES)) > 0.2).astype(jnp.float32)
    diffuse_mask = (jax.random.uniform(k6, (B, NUM_RES)) > 0.5).astype(jnp.float32)
    pos = jnp.broadcast_to(jnp.arange(NUM_RES, dtype=jnp.float32)[None, :], (B, NUM_RES))

    out = node_feature_net(so3_t, r3_t, res_mask, diffuse_mask, pos, params)
    out = jax.block_until_ready(out)

    ref = node_feature_net_ref(so3_t, r3_t, res_mask, diffuse_mask, pos,
                               W_full, bias_row[0])
    assert out.shape == (B, NUM_RES, C_S)
    assert jnp.allclose(out, ref, atol=1e-3, rtol=1e-3), \
        f"max abs diff {jnp.max(jnp.abs(out - ref))}"

    print("KERNEL_OK")
</pallas_src>

<mosaic_0001>
module attributes {stable_mosaic.version = 11 : i64} {
  func.func @_node_feature_kernel(%arg0: i32, %arg1: memref<32x8xf32, #tpu.memory_space<vmem>>, %arg2: memref<1x64xf32, #tpu.memory_space<vmem>>, %arg3: memref<64x64xf32, #tpu.memory_space<vmem>>, %arg4: memref<1x64xf32, #tpu.memory_space<vmem>>, %arg5: memref<1x64xf32, #tpu.memory_space<vmem>>, %arg6: memref<32x64xf32, #tpu.memory_space<vmem>>) attributes {dimension_semantics = [#tpu.dimension_semantics<arbitrary>], iteration_bounds = array<i64: 1>, scalar_prefetch = 0 : i64, scratch_operands = 0 : i64, tpu.core_type = #tpu.core_type<tc>, window_params = [{pipeline_mode = #tpu.pipeline_mode<synchronous>, transform_indices = @transform_0, window_bounds = array<i64: 32, 8>}, {pipeline_mode = #tpu.pipeline_mode<synchronous>, transform_indices = @transform_1, window_bounds = array<i64: 1, 64>}, {pipeline_mode = #tpu.pipeline_mode<synchronous>, transform_indices = @transform_2, window_bounds = array<i64: 64, 64>}, {pipeline_mode = #tpu.pipeline_mode<synchronous>, transform_indices = @transform_3, window_bounds = array<i64: 1, 64>}, {pipeline_mode = #tpu.pipeline_mode<synchronous>, transform_indices = @transform_4, window_bounds = array<i64: 1, 64>}, {pipeline_mode = #tpu.pipeline_mode<synchronous>, transform_indices = @transform_5, window_bounds = array<i64: 32, 64>}]} {
    %c0 = arith.constant 0 : index
    %c0_0 = arith.constant 0 : index
    %0 = vector.load %arg1[%c0, %c0_0] : memref<32x8xf32, #tpu.memory_space<vmem>>, vector<32x8xf32>
    %1 = vector.extract_strided_slice %0 {offsets = [0, 0], sizes = [32, 1], strides = [1, 1]} : vector<32x8xf32> to vector<32x1xf32>
    %2 = vector.extract_strided_slice %0 {offsets = [0, 1], sizes = [32, 1], strides = [1, 1]} : vector<32x8xf32> to vector<32x1xf32>
    %3 = vector.extract_strided_slice %0 {offsets = [0, 2], sizes = [32, 1], strides = [1, 1]} : vector<32x8xf32> to vector<32x1xf32>
    %4 = vector.extract_strided_slice %0 {offsets = [0, 3], sizes = [32, 1], strides = [1, 1]} : vector<32x8xf32> to vector<32x1xf32>
    %5 = vector.extract_strided_slice %0 {offsets = [0, 4], sizes = [32, 1], strides = [1, 1]} : vector<32x8xf32> to vector<32x1xf32>
    %6 = tpu.iota {dimensions = array<i32: 1>} : vector<32x64xi32>
    %c32_i32 = arith.constant 32 : i32
    %7 = vector.broadcast %c32_i32 : i32 to vector<32x64xi32>
    %8 = arith.cmpi slt, %6, %7 : vector<32x64xi32>
    %c48_i32 = arith.constant 48 : i32
    %9 = vector.broadcast %c48_i32 : i32 to vector<32x64xi32>
    %10 = arith.cmpi slt, %6, %9 : vector<32x64xi32>
    %11 = vector.shape_cast %4 : vector<32x1xf32> to vector<32x1xf32>
    %12 = vector.broadcast %11 : vector<32x1xf32> to vector<32x64xf32>
    %13 = vector.shape_cast %5 : vector<32x1xf32> to vector<32x1xf32>
    %14 = vector.broadcast %13 : vector<32x1xf32> to vector<32x64xf32>
    %15 = arith.select %10, %12, %14 : vector<32x64xi1>, vector<32x64xf32>
    %16 = vector.shape_cast %1 : vector<32x1xf32> to vector<32x1xf32>
    %17 = vector.broadcast %16 : vector<32x1xf32> to vector<32x64xf32>
    %18 = arith.select %8, %17, %15 : vector<32x64xi1>, vector<32x64xf32>
    %c0_1 = arith.constant 0 : index
    %c0_2 = arith.constant 0 : index
    %19 = vector.load %arg2[%c0_1, %c0_2] : memref<1x64xf32, #tpu.memory_space<vmem>>, vector<1x64xf32>
    %20 = vector.broadcast %19 : vector<1x64xf32> to vector<32x64xf32>
    %21 = arith.mulf %18, %20 : vector<32x64xf32>
    %c16_i32 = arith.constant 16 : i32
    %22 = vector.broadcast %c16_i32 : i32 to vector<32x64xi32>
    %23 = arith.cmpi slt, %6, %22 : vector<32x64xi32>
    %c32_i32_3 = arith.constant 32 : i32
    %24 = vector.broadcast %c32_i32_3 : i32 to vector<32x64xi32>
    %25 = arith.cmpi sge, %6, %24 : vector<32x64xi32>
    %c40_i32 = arith.constant 40 : i32
    %26 = vector.broadcast %c40_i32 : i32 to vector<32x64xi32>
    %27 = arith.cmpi slt, %6, %26 : vector<32x64xi32>
    %28 = arith.andi %25, %27 : vector<32x64xi1>
    %29 = arith.ori %23, %28 : vector<32x64xi1>
    %c48_i32_4 = arith.constant 48 : i32
    %30 = vector.broadcast %c48_i32_4 : i32 to vector<32x64xi32>
    %31 = arith.cmpi sge, %6, %30 : vector<32x64xi32>
    %c56_i32 = arith.constant 56 : i32
    %32 = vector.broadcast %c56_i32 : i32 to vector<32x64xi32>
    %33 = arith.cmpi slt, %6, %32 : vector<32x64xi32>
    %34 = arith.andi %31, %33 : vector<32x64xi1>
    %35 = arith.ori %29, %34 : vector<32x64xi1>
    %36 = math.sin %21 : vector<32x64xf32>
    %37 = math.cos %21 : vector<32x64xf32>
    %38 = arith.select %35, %36, %37 : vector<32x64xi1>, vector<32x64xf32>
    %39 = vector.broadcast %2 : vector<32x1xf32> to vector<32x64xf32>
    %40 = arith.mulf %38, %39 : vector<32x64xf32>
    %c0_5 = arith.constant 0 : index
    %c0_6 = arith.constant 0 : index
    %41 = vector.load %arg3[%c0_5, %c0_6] : memref<64x64xf32, #tpu.memory_space<vmem>>, vector<64x64xf32>
    %cst = arith.constant dense<0.000000e+00> : vector<32x64xf32>
    %42 = tpu.matmul %40, %41, %cst {dimension_numbers = #tpu.dot_dimension_numbers<[1], [0], [0], [1], [0, 0, 1, 1], [], []>} : vector<32x64xf32>, vector<64x64xf32>, vector<32x64xf32> -> vector<32x64xf32>
    %c0_7 = arith.constant 0 : index
    %c0_8 = arith.constant 0 : index
    %43 = vector.load %arg4[%c0_7, %c0_8] : memref<1x64xf32, #tpu.memory_space<vmem>>, vector<1x64xf32>
    %44 = vector.broadcast %3 : vector<32x1xf32> to vector<32x64xf32>
    %45 = vector.broadcast %43 : vector<1x64xf32> to vector<32x64xf32>
    %46 = arith.mulf %44, %45 : vector<32x64xf32>
    %47 = arith.addf %42, %46 : vector<32x64xf32>
    %c0_9 = arith.constant 0 : index
    %c0_10 = arith.constant 0 : index
    %48 = vector.load %arg5[%c0_9, %c0_10] : memref<1x64xf32, #tpu.memory_space<vmem>>, vector<1x64xf32>
    %49 = vector.broadcast %48 : vector<1x64xf32> to vector<32x64xf32>
    %50 = arith.addf %47, %49 : vector<32x64xf32>
    %c0_11 = arith.constant 0 : index
    %c0_12 = arith.constant 0 : index
    %51 = vector.load %arg6[%c0_11, %c0_12] : memref<32x64xf32, #tpu.memory_space<vmem>>, vector<32x64xf32>
    tpu.vector_store %arg6[%c0_11, %c0_12], %50 {strides = array<i32>} : memref<32x64xf32, #tpu.memory_space<vmem>>, vector<32x64xf32>,
    return
  }
  func.func @transform_0(%arg0: i32) -> (i32, i32) {
    %c0_i32 = arith.constant 0 : i32
    %c0_i32_0 = arith.constant 0 : i32
    %c0_i32_1 = arith.constant 0 : i32
    return %c0_i32, %c0_i32_0 : i32, i32
  }
  func.func @transform_1(%arg0: i32) -> (i32, i32) {
    %c0_i32 = arith.constant 0 : i32
    %c0_i32_0 = arith.constant 0 : i32
    %c0_i32_1 = arith.constant 0 : i32
    return %c0_i32, %c0_i32_0 : i32, i32
  }
  func.func @transform_2(%arg0: i32) -> (i32, i32) {
    %c0_i32 = arith.constant 0 : i32
    %c0_i32_0 = arith.constant 0 : i32
    %c0_i32_1 = arith.constant 0 : i32
    return %c0_i32, %c0_i32_0 : i32, i32
  }
  func.func @transform_3(%arg0: i32) -> (i32, i32) {
    %c0_i32 = arith.constant 0 : i32
    %c0_i32_0 = arith.constant 0 : i32
    %c0_i32_1 = arith.constant 0 : i32
    return %c0_i32, %c0_i32_0 : i32, i32
  }
  func.func @transform_4(%arg0: i32) -> (i32, i32) {
    %c0_i32 = arith.constant 0 : i32
    %c0_i32_0 = arith.constant 0 : i32
    %c0_i32_1 = arith.constant 0 : i32
    return %c0_i32, %c0_i32_0 : i32, i32
  }
  func.func @transform_5(%arg0: i32) -> (i32, i32) {
    %c0_i32 = arith.constant 0 : i32
    %c0_i32_0 = arith.constant 0 : i32
    %c0_i32_1 = arith.constant 0 : i32
    return %c0_i32, %c0_i32_0 : i32, i32
  }
}

</mosaic_0001>

<llo_original>
// kernel: tpu_custom_call.1
$region0: #{tpu_custom_call.1}
  #allocation0 [shape = 'u32[]', space=smem, size = 0x4, offset = 0x4, fixed_abs, tag = 'smem constant byte address 0x4 - core index']
  #allocation1 [shape = 'u32[144,128]{1,0:T(1,128)}', space=vmem, size = 0x12000, scoped, tag = 'internal scratch']
  %s0 = inlined_call_operand.vmem [shape: f32[32,8], index: 0, kind: input, shape index: {}]
  %s1 = inlined_call_operand.vmem [shape: f32[1,64], index: 1, kind: input, shape index: {}]
  %s2 = inlined_call_operand.hbm [shape: f32[64,64], index: 2, kind: input, shape index: {}]
  %s3 = inlined_call_operand.vmem [shape: f32[1,64], index: 3, kind: input, shape index: {}]
  %s4 = inlined_call_operand.vmem [shape: f32[1,64], index: 4, kind: input, shape index: {}]
  %s5 = inlined_call_operand.hbm [shape: f32[32,64], index: 5, kind: output, shape index: {}]
  %s6 = sld [smem:[#allocation0]]
  $region34: #{tpu_custom_call.1} parent=0
    _
  %s8 = ssub.s32 1, %s6
  %s9 = scalar_select 0, %s8, %s6
  $region1: #{tpu_custom_call.1} parent=0
    #allocation2 [shape = 'u8[32768]{0}', space=vmem, size = 0x8000, scoped, tag = 'input window, operand 2, single buffered']
    #allocation3 [shape = 's32[1]{0}', space=sflag, size = 0x4, scoped, tag = 'scoped memory for tpu_custom_call.1']
    #allocation4 [shape = 's32[1]{0}', space=sflag, size = 0x4, scoped, tag = 'scoped memory for tpu_custom_call.1']
    #allocation5 [shape = 'u8[16384]{0}', space=vmem, size = 0x4000, scoped, tag = 'output window, operand 0, single buffered']
    %10 = vsyncpa [#allocation3], 0
    %11 = vsyncpa [#allocation4], 0
    // Predicated region
    $region2: #{tpu_custom_call.1} parent=1 // pred_check
      _
    $region3: #{tpu_custom_call.1} parent=1 // pred_check_branch
      %13 = sbr.rel (0) target = $region5
    $region4: #{tpu_custom_call.1} parent=1 // pred_region
      _
    $region5: #{tpu_custom_call.1} parent=1 // pred_fallthru
      _
    // Predicated region
    $region6: #{tpu_custom_call.1} parent=1 // pred_check
      _
    $region7: #{tpu_custom_call.1} parent=1 // pred_check_branch
      %15 = sbr.rel (0) target = $region9
    $region8: #{tpu_custom_call.1} parent=1 // pred_region
      _
    $region9: #{tpu_custom_call.1} parent=1 // pred_fallthru
      _
    // Predicated region
    $region10: #{tpu_custom_call.1} parent=1 // pred_check
      _
    $region11: #{tpu_custom_call.1} parent=1 // pred_check_branch
      %17 = sbr.rel (0) target = $region13
    $region12: #{tpu_custom_call.1} parent=1 // pred_region
      %s19 = ssub.s32 1024, 1024
      %20 = vsyncadd [#allocation3], %s19
      %s21 = sshll.u32 [#allocation2], 4
      %s22 = int_to_ptr.vmem [resolvable:$true] %s21
      %27 = dma.hbm_to_vmem [thread:$0]  %s2, 1024, %s22, [#allocation3], 128, 128, 8
    $region13: #{tpu_custom_call.1} parent=1 // pred_fallthru
      _
    // Predicated region
    $region14: #{tpu_custom_call.1} parent=1 // pred_check
      _
    $region15: #{tpu_custom_call.1} parent=1 // pred_check_branch
      %29 = sbr.rel (0) target = $region17
    $region16: #{tpu_custom_call.1} parent=1 // pred_region
      _
    $region17: #{tpu_custom_call.1} parent=1 // pred_fallthru
      _
    // Predicated region
    $region18: #{tpu_custom_call.1} parent=1 // pred_check
      _
    $region19: #{tpu_custom_call.1} parent=1 // pred_check_branch
      %31 = sbr.rel (0) target = $region21
    $region20: #{tpu_custom_call.1} parent=1 // pred_region
      _
    $region21: #{tpu_custom_call.1} parent=1 // pred_fallthru
      _
    // Predicated region
    $region22: #{tpu_custom_call.1} parent=1 // pred_check
      _
    $region23: #{tpu_custom_call.1} parent=1 // pred_check_branch
      %33 = sbr.rel (0) target = $region25
    $region24: #{tpu_custom_call.1} parent=1 // pred_region
      %34 = dma.done [#allocation3], 1024
    $region25: #{tpu_custom_call.1} parent=1 // pred_fallthru
      _
    %v35 = vld [vmem:[%s0] sm:$0xff]
    %v36 = vld [vmem:[%s0 + $0x8] sm:$0xff]
    %v37 = vld [vmem:[%s0 + $0x10] sm:$0xff]
    %v38 = vld [vmem:[%s0 + $0x18] sm:$0xff]
    %v39 = vlaneseq
    %v40 = vand.u32 %v39, 127
    %vm41 = vcmp.lt.s32.totalorder %v40, 32
    %vm42 = vcmp.lt.s32.totalorder %v40, 48
    %44 = vset.pattern.permute.xlu0 3
    %45 = vperm.xlu0 %44, %v35
    %v46 = vpop.permute.xlu0 %45
    %49 = vset.pattern.permute.xlu0 3
    %50 = vperm.xlu0 %49, %v36
    %v51 = vpop.permute.xlu0 %50
    %54 = vset.pattern.permute.xlu0 3
    %55 = vperm.xlu0 %54, %v37
    %v56 = vpop.permute.xlu0 %55
    %59 = vset.pattern.permute.xlu0 3
    %60 = vperm.xlu0 %59, %v38
    %v61 = vpop.permute.xlu0 %60
    %63 = vset.pattern.permute.xlu0 4
    %64 = vperm.xlu0 %63, %v35
    %v65 = vpop.permute.xlu0 %64
    %67 = vset.pattern.permute.xlu0 4
    %68 = vperm.xlu0 %67, %v36
    %v69 = vpop.permute.xlu0 %68
    %71 = vset.pattern.permute.xlu0 4
    %72 = vperm.xlu0 %71, %v37
    %v73 = vpop.permute.xlu0 %72
    %75 = vset.pattern.permute.xlu0 4
    %76 = vperm.xlu0 %75, %v38
    %v77 = vpop.permute.xlu0 %76
    %v79 = vsel %vm42, %v46, %v65
    %v80 = vsel %vm42, %v51, %v69
    %v81 = vsel %vm42, %v56, %v73
    %v82 = vsel %vm42, %v61, %v77
    %83 = vset.pattern.permute.xlu0 0
    %84 = vperm.xlu0 %83, %v35
    %v85 = vpop.permute.xlu0 %84
    %87 = vset.pattern.permute.xlu0 0
    %88 = vperm.xlu0 %87, %v36
    %v89 = vpop.permute.xlu0 %88
    %91 = vset.pattern.permute.xlu0 0
    %92 = vperm.xlu0 %91, %v37
    %v93 = vpop.permute.xlu0 %92
    %95 = vset.pattern.permute.xlu0 0
    %96 = vperm.xlu0 %95, %v38
    %v97 = vpop.permute.xlu0 %96
    %v99 = vsel %vm41, %v85, %v79
    %v100 = vsel %vm41, %v89, %v80
    %v101 = vsel %vm41, %v93, %v81
    %v102 = vsel %vm41, %v97, %v82
    %v103 = vld [vmem:[%s1] sm:$0x1]
    %v105 = vlaneseq
    %v106 = vshrl.u32 %v105, 7
    %v107 = vsub.s32 0, %v106
    %v108 = vrot.slane %v103, %v107
    %v110 = vmul.f32 %v99, %v108
    %v111 = vmul.f32 %v100, %v108
    %v112 = vmul.f32 %v101, %v108
    %v113 = vmul.f32 %v102, %v108
    %vm114 = vcmp.lt.s32.totalorder %v40, 16
    %vm115 = vcmp.ge.s32.totalorder %v40, 32
    %vm116 = vcmp.lt.s32.totalorder %v40, 40
    %vm117 = vmand %vm115, %vm116
    %vm118 = vmor %vm114, %vm117
    %vm119 = vcmp.ge.s32.totalorder %v40, 48
    %vm120 = vcmp.lt.s32.totalorder %v40, 56
    %vm121 = vmand %vm119, %vm120
    %vm122 = vmor %vm118, %vm121
    %v123 = vand.u32 2147483647, %v110
    %vm124 = vcmp.le.f32.partialorder %v123, 0.7853982
    %vm125 = vcmp.lt.s32.totalorder %v110, 0
    %v126 = vand.u32 %v110, 2139095040
    %v127 = vshrl.u32 %v126, 23
    %v128 = vsub.s32 %v127, 127
    %v129 = vand.u32 2147483647, %v110
    %v130 = vand.u32 %v129, 8388607
    %v131 = vor.u32 %v130, 8388608
    %v132 = vsub.s32 0, %v131
    %v133 = vadd.s32 %v128, 1
    %vm134 = vcmp.gt.s32.totalorder %v133, 0
    %v135 = vsel %vm134, %v133, 0
    %v136 = vshrl.u32 %v135, 5
    %v137 = vand.u32 %v135, 31
    %v138 = vsub.s32 32, %v137
    %v139 = vshrl.u32 683565275, %v138
    %v140 = vshll.u32 683565275, %v137
    %v141 = vshrl.u32 2475754826, %v138
    %v142 = vor.u32 %v140, %v141
    %v143 = vshll.u32 2475754826, %v137
    %v144 = vshrl.u32 2131351028, %v138
    %v145 = vor.u32 %v143, %v144
    %v146 = vshll.u32 2131351028, %v137
    %v147 = vshrl.u32 2102212464, %v138
    %v148 = vor.u32 %v146, %v147
    %v149 = vshll.u32 2102212464, %v137
    %v150 = vshrl.u32 920167782, %v138
    %v151 = vor.u32 %v149, %v150
    %v152 = vshll.u32 920167782, %v137
    %v153 = vshrl.u32 1326507024, %v138
    %v154 = vor.u32 %v152, %v153
    %vm155 = vcmp.lt.s32.totalorder %v136, 1
    %vm156 = vcmp.lt.s32.totalorder %v136, 2
    %vm157 = vcmp.lt.s32.totalorder %v136, 3
    %vm158 = vcmp.lt.s32.totalorder %v136, 4
    %v159 = vsel %vm155, %v139, %v142
    %v160 = vsel %vm158, %v148, 2102212464
    %v161 = vsel %vm157, %v145, %v160
    %v162 = vsel %vm156, %v159, %v161
    %v163 = vsel %vm155, %v142, %v145
    %v164 = vsel %vm158, %v151, 920167782
    %v165 = vsel %vm157, %v148, %v164
    %v166 = vsel %vm156, %v163, %v165
    %v167 = vsel %vm155, %v145, %v148
    %v168 = vsel %vm158, %v154, 1326507024
    %v169 = vsel %vm157, %v151, %v168
    %v170 = vsel %vm156, %v167, %v169
    %v171 = vshll.u32 %v131, 8
    %v172 = vmul.u32.u64.compose %v171, %v170
    %v173 = vextract.low.u32 %v172
    %v174 = vextract.high.u32 %v172
    %v175 = vmul.u32.u64.compose %v171, %v166
    %v176 = vextract.low.u32 %v175
    %v177 = vextract.high.u32 %v175
    %v178 = vmul.u32 %v171, %v162
    %v179 = vadd.s32 %v174, %v176
    %vm180 = vc.u32 %v174, %v176
    %v181 = vadd.s32 %v177, 1
    %v182 = vsel %vm180, %v181, %v177
    %v183 = vadd.s32 %v178, %v182
    %v184 = vadd.s32 %v183, 536870912
    %v185 = vshrl.u32 %v184, 30
    %v186 = vshll.u32 %v185, 30
    %v187 = vsub.s32 %v183, %v186
    %vm188 = vcmp.lt.s32.totalorder %v187, 0
    %v189 = vsub.s32 0, %v187
    %v190 = vsel %vm188, %v189, %v187
    %v191 = vclz %v190
    %v192 = vsub.s32 %v191, 2
    %vm193 = vcmp.gt.s32.totalorder 0, %v192
    %v194 = vsel %vm193, 0, %v192
    %v195 = vsub.s32 32, %v194
    %v196 = vshll.u32 %v187, %v194
    %v197 = vshrl.u32 %v179, %v195
    %v198 = vor.u32 %v196, %v197
    %v199 = vsub.s32 4294967266, %v194
    %v200 = vadd.s32 %v199, 127
    %v201 = vshll.u32 %v200, 23
    %v202 = vor.u32 4788187, %v201
    %v203 = vand.u32 2147483647, %v202
    %v205 = vcvt.s32.f32 %v198
    %v206 = vmul.f32 %v205, %v203
    %v207 = vxor.u32 %v206, 2147483648
    %v208 = vsel %vm125, %v207, %v206
    %v209 = vsub.s32 4, %v185
    %v210 = vsel %vm125, %v209, %v185
    %v211 = vsel %vm124, %v110, %v208
    %v212 = vsel %vm124, 0, %v210
    %v213 = vcosq.f32.pop %v211
    %v214 = vsinq.f32.pop %v211
    %vm215 = vweird.f32 %v110
    %v216 = vadd.s32 %v212, 3
    %v217 = vand.u32 %v216, 3
    %vm218 = vcmp.lt.s32.totalorder %v217, 2
    %vm219 = vcmp.eq.s32.totalorder %v217, 0
    %v220 = vxor.u32 %v214, 2147483648
    %v221 = vsel %vm219, %v213, %v220
    %vm222 = vcmp.eq.s32.totalorder %v217, 2
    %v223 = vxor.u32 %v213, 2147483648
    %v224 = vsel %vm222, %v223, %v214
    %v225 = vsel %vm218, %v221, %v224
    %v226 = vsel %vm215, nan, %v225
    %v227 = vand.u32 2147483647, %v111
    %vm228 = vcmp.le.f32.partialorder %v227, 0.7853982
    %vm229 = vcmp.lt.s32.totalorder %v111, 0
    %v230 = vand.u32 %v111, 2139095040
    %v231 = vshrl.u32 %v230, 23
    %v232 = vsub.s32 %v231, 127
    %v233 = vand.u32 2147483647, %v111
    %v234 = vand.u32 %v233, 8388607
    %v235 = vor.u32 %v234, 8388608
    %v236 = vsub.s32 0, %v235
    %v237 = vadd.s32 %v232, 1
    %vm238 = vcmp.gt.s32.totalorder %v237, 0
    %v239 = vsel %vm238, %v237, 0
    %v240 = vshrl.u32 %v239, 5
    %v241 = vand.u32 %v239, 31
    %v242 = vsub.s32 32, %v241
    %v243 = vshrl.u32 683565275, %v242
    %v244 = vshll.u32 683565275, %v241
    %v245 = vshrl.u32 2475754826, %v242
    %v246 = vor.u32 %v244, %v245
    %v247 = vshll.u32 2475754826, %v241
    %v248 = vshrl.u32 2131351028, %v242
    %v249 = vor.u32 %v247, %v248
    %v250 = vshll.u32 2131351028, %v241
    %v251 = vshrl.u32 2102212464, %v242
    %v252 = vor.u32 %v250, %v251
    %v253 = vshll.u32 2102212464, %v241
    %v254 = vshrl.u32 920167782, %v242
    %v255 = vor.u32 %v253, %v254
    %v256 = vshll.u32 920167782, %v241
    %v257 = vshrl.u32 1326507024, %v242
    %v258 = vor.u32 %v256, %v257
    %vm259 = vcmp.lt.s32.totalorder %v240, 1
    %vm260 = vcmp.lt.s32.totalorder %v240, 2
    %vm261 = vcmp.lt.s32.totalorder %v240, 3
    %vm262 = vcmp.lt.s32.totalorder %v240, 4
    %v263 = vsel %vm259, %v243, %v246
    %v264 = vsel %vm262, %v252, 2102212464
    %v265 = vsel %vm261, %v249, %v264
    %v266 = vsel %vm260, %v263, %v265
    %v267 = vsel %vm259, %v246, %v249
    %v268 = vsel %vm262, %v255, 920167782
    %v269 = vsel %vm261, %v252, %v268
    %v270 = vsel %vm260, %v267, %v269
    %v271 = vsel %vm259, %v249, %v252
    %v272 = vsel %vm262, %v258, 1326507024
    %v273 = vsel %vm261, %v255, %v272
    %v274 = vsel %vm260, %v271, %v273
    %v275 = vshll.u32 %v235, 8
    %v276 = vmul.u32.u64.compose %v275, %v274
    %v277 = vextract.low.u32 %v276
    %v278 = vextract.high.u32 %v276
    %v279 = vmul.u32.u64.compose %v275, %v270
    %v280 = vextract.low.u32 %v279
    %v281 = vextract.high.u32 %v279
    %v282 = vmul.u32 %v275, %v266
    %v283 = vadd.s32 %v278, %v280
    %vm284 = vc.u32 %v278, %v280
    %v285 = vadd.s32 %v281, 1
    %v286 = vsel %vm284, %v285, %v281
    %v287 = vadd.s32 %v282, %v286
    %v288 = vadd.s32 %v287, 536870912
    %v289 = vshrl.u32 %v288, 30
    %v290 = vshll.u32 %v289, 30
    %v291 = vsub.s32 %v287, %v290
    %vm292 = vcmp.lt.s32.totalorder %v291, 0
    %v293 = vsub.s32 0, %v291
    %v294 = vsel %vm292, %v293, %v291
    %v295 = vclz %v294
    %v296 = vsub.s32 %v295, 2
    %vm297 = vcmp.gt.s32.totalorder 0, %v296
    %v298 = vsel %vm297, 0, %v296
    %v299 = vsub.s32 32, %v298
    %v300 = vshll.u32 %v291, %v298
    %v301 = vshrl.u32 %v283, %v299
    %v302 = vor.u32 %v300, %v301
    %v303 = vsub.s32 4294967266, %v298
    %v304 = vadd.s32 %v303, 127
    %v305 = vshll.u32 %v304, 23
    %v306 = vor.u32 4788187, %v305
    %v307 = vand.u32 2147483647, %v306
    %v309 = vcvt.s32.f32 %v302
    %v310 = vmul.f32 %v309, %v307
    %v311 = vxor.u32 %v310, 2147483648
    %v312 = vsel %vm229, %v311, %v310
    %v313 = vsub.s32 4, %v289
    %v314 = vsel %vm229, %v313, %v289
    %v315 = vsel %vm228, %v111, %v312
    %v316 = vsel %vm228, 0, %v314
    %v317 = vcosq.f32.pop %v315
    %v318 = vsinq.f32.pop %v315
    %vm319 = vweird.f32 %v111
    %v320 = vadd.s32 %v316, 3
    %v321 = vand.u32 %v320, 3
    %vm322 = vcmp.lt.s32.totalorder %v321, 2
    %vm323 = vcmp.eq.s32.totalorder %v321, 0
    %v324 = vxor.u32 %v318, 2147483648
    %v325 = vsel %vm323, %v317, %v324
    %vm326 = vcmp.eq.s32.totalorder %v321, 2
    %v327 = vxor.u32 %v317, 2147483648
    %v328 = vsel %vm326, %v327, %v318
    %v329 = vsel %vm322, %v325, %v328
    %v330 = vsel %vm319, nan, %v329
    %v331 = vand.u32 2147483647, %v112
    %vm332 = vcmp.le.f32.partialorder %v331, 0.7853982
    %vm333 = vcmp.lt.s32.totalorder %v112, 0
    %v334 = vand.u32 %v112, 2139095040
    %v335 = vshrl.u32 %v334, 23
    %v336 = vsub.s32 %v335, 127
    %v337 = vand.u32 2147483647, %v112
    %v338 = vand.u32 %v337, 8388607
    %v339 = vor.u32 %v338, 8388608
    %v340 = vsub.s32 0, %v339
    %v341 = vadd.s32 %v336, 1
    %vm342 = vcmp.gt.s32.totalorder %v341, 0
    %v343 = vsel %vm342, %v341, 0
    %v344 = vshrl.u32 %v343, 5
    %v345 = vand.u32 %v343, 31
    %v346 = vsub.s32 32, %v345
    %v347 = vshrl.u32 683565275, %v346
    %v348 = vshll.u32 683565275, %v345
    %v349 = vshrl.u32 2475754826, %v346
    %v350 = vor.u32 %v348, %v349
    %v351 = vshll.u32 2475754826, %v345
    %v352 = vshrl.u32 2131351028, %v346
    %v353 = vor.u32 %v351, %v352
    %v354 = vshll.u32 2131351028, %v345
    %v355 = vshrl.u32 2102212464, %v346
    %v356 = vor.u32 %v354, %v355
    %v357 = vshll.u32 2102212464, %v345
    %v358 = vshrl.u32 920167782, %v346
    %v359 = vor.u32 %v357, %v358
    %v360 = vshll.u32 920167782, %v345
    %v361 = vshrl.u32 1326507024, %v346
    %v362 = vor.u32 %v360, %v361
    %vm363 = vcmp.lt.s32.totalorder %v344, 1
    %vm364 = vcmp.lt.s32.totalorder %v344, 2
    %vm365 = vcmp.lt.s32.totalorder %v344, 3
    %vm366 = vcmp.lt.s32.totalorder %v344, 4
    %v367 = vsel %vm363, %v347, %v350
    %v368 = vsel %vm366, %v356, 2102212464
    %v369 = vsel %vm365, %v353, %v368
    %v370 = vsel %vm364, %v367, %v369
    %v371 = vsel %vm363, %v350, %v353
    %v372 = vsel %vm366, %v359, 920167782
    %v373 = vsel %vm365, %v356, %v372
    %v374 = vsel %vm364, %v371, %v373
    %v375 = vsel %vm363, %v353, %v356
    %v376 = vsel %vm366, %v362, 1326507024
    %v377 = vsel %vm365, %v359, %v376
    %v378 = vsel %vm364, %v375, %v377
    %v379 = vshll.u32 %v339, 8
    %v380 = vmul.u32.u64.compose %v379, %v378
    %v381 = vextract.low.u32 %v380
    %v382 = vextract.high.u32 %v380
    %v383 = vmul.u32.u64.compose %v379, %v374
    %v384 = vextract.low.u32 %v383
    %v385 = vextract.high.u32 %v383
    %v386 = vmul.u32 %v379, %v370
    %v387 = vadd.s32 %v382, %v384
    %vm388 = vc.u32 %v382, %v384
    %v389 = vadd.s32 %v385, 1
    %v390 = vsel %vm388, %v389, %v385
    %v391 = vadd.s32 %v386, %v390
    %v392 = vadd.s32 %v391, 536870912
    %v393 = vshrl.u32 %v392, 30
    %v394 = vshll.u32 %v393, 30
    %v395 = vsub.s32 %v391, %v394
    %vm396 = vcmp.lt.s32.totalorder %v395, 0
    %v397 = vsub.s32 0, %v395
    %v398 = vsel %vm396, %v397, %v395
    %v399 = vclz %v398
    %v400 = vsub.s32 %v399, 2
    %vm401 = vcmp.gt.s32.totalorder 0, %v400
    %v402 = vsel %vm401, 0, %v400
    %v403 = vsub.s32 32, %v402
    %v404 = vshll.u32 %v395, %v402
    %v405 = vshrl.u32 %v387, %v403
    %v406 = vor.u32 %v404, %v405
    %v407 = vsub.s32 4294967266, %v402
    %v408 = vadd.s32 %v407, 127
    %v409 = vshll.u32 %v408, 23
    %v410 = vor.u32 4788187, %v409
    %v411 = vand.u32 2147483647, %v410
    %v413 = vcvt.s32.f32 %v406
    %v414 = vmul.f32 %v413, %v411
    %v415 = vxor.u32 %v414, 2147483648
    %v416 = vsel %vm333, %v415, %v414
    %v417 = vsub.s32 4, %v393
    %v418 = vsel %vm333, %v417, %v393
    %v419 = vsel %vm332, %v112, %v416
    %v420 = vsel %vm332, 0, %v418
    %v421 = vcosq.f32.pop %v419
    %v422 = vsinq.f32.pop %v419
    %vm423 = vweird.f32 %v112
    %v424 = vadd.s32 %v420, 3
    %v425 = vand.u32 %v424, 3
    %vm426 = vcmp.lt.s32.totalorder %v425, 2
    %vm427 = vcmp.eq.s32.totalorder %v425, 0
    %v428 = vxor.u32 %v422, 2147483648
    %v429 = vsel %vm427, %v421, %v428
    %vm430 = vcmp.eq.s32.totalorder %v425, 2
    %v431 = vxor.u32 %v421, 2147483648
    %v432 = vsel %vm430, %v431, %v422
    %v433 = vsel %vm426, %v429, %v432
    %v434 = vsel %vm423, nan, %v433
    %v435 = vand.u32 2147483647, %v113
    %vm436 = vcmp.le.f32.partialorder %v435, 0.7853982
    %vm437 = vcmp.lt.s32.totalorder %v113, 0
    %v438 = vand.u32 %v113, 2139095040
    %v439 = vshrl.u32 %v438, 23
    %v440 = vsub.s32 %v439, 127
    %v441 = vand.u32 2147483647, %v113
    %v442 = vand.u32 %v441, 8388607
    %v443 = vor.u32 %v442, 8388608
    %v444 = vsub.s32 0, %v443
    %v445 = vadd.s32 %v440, 1
    %vm446 = vcmp.gt.s32.totalorder %v445, 0
    %v447 = vsel %vm446, %v445, 0
    %v448 = vshrl.u32 %v447, 5
    %v449 = vand.u32 %v447, 31
    %v450 = vsub.s32 32, %v449
    %v451 = vshrl.u32 683565275, %v450
    %v452 = vshll.u32 683565275, %v449
    %v453 = vshrl.u32 2475754826, %v450
    %v454 = vor.u32 %v452, %v453
    %v455 = vshll.u32 2475754826, %v449
    %v456 = vshrl.u32 2131351028, %v450
    %v457 = vor.u32 %v455, %v456
    %v458 = vshll.u32 2131351028, %v449
    %v459 = vshrl.u32 2102212464, %v450
    %v460 = vor.u32 %v458, %v459
    %v461 = vshll.u32 2102212464, %v449
    %v462 = vshrl.u32 920167782, %v450
    %v463 = vor.u32 %v461, %v462
    %v464 = vshll.u32 920167782, %v449
    %v465 = vshrl.u32 1326507024, %v450
    %v466 = vor.u32 %v464, %v465
    %vm467 = vcmp.lt.s32.totalorder %v448, 1
    %vm468 = vcmp.lt.s32.totalorder %v448, 2
    %vm469 = vcmp.lt.s32.totalorder %v448, 3
    %vm470 = vcmp.lt.s32.totalorder %v448, 4
    %v471 = vsel %vm467, %v451, %v454
    %v472 = vsel %vm470, %v460, 2102212464
    %v473 = vsel %vm469, %v457, %v472
    %v474 = vsel %vm468, %v471, %v473
    %v475 = vsel %vm467, %v454, %v457
    %v476 = vsel %vm470, %v463, 920167782
    %v477 = vsel %vm469, %v460, %v476
    %v478 = vsel %vm468, %v475, %v477
    %v479 = vsel %vm467, %v457, %v460
    %v480 = vsel %vm470, %v466, 1326507024
    %v481 = vsel %vm469, %v463, %v480
    %v482 = vsel %vm468, %v479, %v481
    %v483 = vshll.u32 %v443, 8
    %v484 = vmul.u32.u64.compose %v483, %v482
    %v485 = vextract.low.u32 %v484
    %v486 = vextract.high.u32 %v484
    %v487 = vmul.u32.u64.compose %v483, %v478
    %v488 = vextract.low.u32 %v487
    %v489 = vextract.high.u32 %v487
    %v490 = vmul.u32 %v483, %v474
    %v491 = vadd.s32 %v486, %v488
    %vm492 = vc.u32 %v486, %v488
    %v493 = vadd.s32 %v489, 1
    %v494 = vsel %vm492, %v493, %v489
    %v495 = vadd.s32 %v490, %v494
    %v496 = vadd.s32 %v495, 536870912
    %v497 = vshrl.u32 %v496, 30
    %v498 = vshll.u32 %v497, 30
    %v499 = vsub.s32 %v495, %v498
    %vm500 = vcmp.lt.s32.totalorder %v499, 0
    %v501 = vsub.s32 0, %v499
    %v502 = vsel %vm500, %v501, %v499
    %v503 = vclz %v502
    %v504 = vsub.s32 %v503, 2
    %vm505 = vcmp.gt.s32.totalorder 0, %v504
    %v506 = vsel %vm505, 0, %v504
    %v507 = vsub.s32 32, %v506
    %v508 = vshll.u32 %v499, %v506
    %v509 = vshrl.u32 %v491, %v507
    %v510 = vor.u32 %v508, %v509
    %v511 = vsub.s32 4294967266, %v506
    %v512 = vadd.s32 %v511, 127
    %v513 = vshll.u32 %v512, 23
    %v514 = vor.u32 4788187, %v513
    %v515 = vand.u32 2147483647, %v514
    %v517 = vcvt.s32.f32 %v510
    %v518 = vmul.f32 %v517, %v515
    %v519 = vxor.u32 %v518, 2147483648
    %v520 = vsel %vm437, %v519, %v518
    %v521 = vsub.s32 4, %v497
    %v522 = vsel %vm437, %v521, %v497
    %v523 = vsel %vm436, %v113, %v520
    %v524 = vsel %vm436, 0, %v522
    %v525 = vcosq.f32.pop %v523
    %v526 = vsinq.f32.pop %v523
    %vm527 = vweird.f32 %v113
    %v528 = vadd.s32 %v524, 3
    %v529 = vand.u32 %v528, 3
    %vm530 = vcmp.lt.s32.totalorder %v529, 2
    %vm531 = vcmp.eq.s32.totalorder %v529, 0
    %v532 = vxor.u32 %v526, 2147483648
    %v533 = vsel %vm531, %v525, %v532
    %vm534 = vcmp.eq.s32.totalorder %v529, 2
    %v535 = vxor.u32 %v525, 2147483648
    %v536 = vsel %vm534, %v535, %v526
    %v537 = vsel %vm530, %v533, %v536
    %v538 = vsel %vm527, nan, %v537
    %v539 = vand.u32 2147483647, %v110
    %vm540 = vcmp.le.f32.partialorder %v539, 0.7853982
    %vm541 = vcmp.lt.s32.totalorder %v110, 0
    %v542 = vand.u32 %v110, 2139095040
    %v543 = vshrl.u32 %v542, 23
    %v544 = vsub.s32 %v543, 127
    %v545 = vand.u32 2147483647, %v110
    %v546 = vand.u32 %v545, 8388607
    %v547 = vor.u32 %v546, 8388608
    %v548 = vsub.s32 0, %v547
    %v549 = vadd.s32 %v544, 1
    %vm550 = vcmp.gt.s32.totalorder %v549, 0
    %v551 = vsel %vm550, %v549, 0
    %v552 = vshrl.u32 %v551, 5
    %v553 = vand.u32 %v551, 31
    %v554 = vsub.s32 32, %v553
    %v555 = vshrl.u32 683565275, %v554
    %v556 = vshll.u32 683565275, %v553
    %v557 = vshrl.u32 2475754826, %v554
    %v558 = vor.u32 %v556, %v557
    %v559 = vshll.u32 2475754826, %v553
    %v560 = vshrl.u32 2131351028, %v554
    %v561 = vor.u32 %v559, %v560
    %v562 = vshll.u32 2131351028, %v553
    %v563 = vshrl.u32 2102212464, %v554
    %v564 = vor.u32 %v562, %v563
    %v565 = vshll.u32 2102212464, %v553
    %v566 = vshrl.u32 920167782, %v554
    %v567 = vor.u32 %v565, %v566
    %v568 = vshll.u32 920167782, %v553
    %v569 = vshrl.u32 1326507024, %v554
    %v570 = vor.u32 %v568, %v569
    %vm571 = vcmp.lt.s32.totalorder %v552, 1
    %vm572 = vcmp.lt.s32.totalorder %v552, 2
    %vm573 = vcmp.lt.s32.totalorder %v552, 3
    %vm574 = vcmp.lt.s32.totalorder %v552, 4
    %v575 = vsel %vm571, %v555, %v558
    %v576 = vsel %vm574, %v564, 2102212464
    %v577 = vsel %vm573, %v561, %v576
    %v578 = vsel %vm572, %v575, %v577
    %v579 = vsel %vm571, %v558, %v561
    %v580 = vsel %vm574, %v567, 920167782
    %v581 = vsel %vm573, %v564, %v580
    %v582 = vsel %vm572, %v579, %v581
    %v583 = vsel %vm571, %v561, %v564
    %v584 = vsel %vm574, %v570, 1326507024
    %v585 = vsel %vm573, %v567, %v584
    %v586 = vsel %vm572, %v583, %v585
    %v587 = vshll.u32 %v547, 8
    %v588 = vmul.u32.u64.compose %v587, %v586
    %v589 = vextract.low.u32 %v588
    %v590 = vextract.high.u32 %v588
    %v591 = vmul.u32.u64.compose %v587, %v582
    %v592 = vextract.low.u32 %v591
    %v593 = vextract.high.u32 %v591
    %v594 = vmul.u32 %v587, %v578
    %v595 = vadd.s32 %v590, %v592
    %vm596 = vc.u32 %v590, %v592
    %v597 = vadd.s32 %v593, 1
    %v598 = vsel %vm596, %v597, %v593
    %v599 = vadd.s32 %v594, %v598
    %v600 = vadd.s32 %v599, 536870912
    %v601 = vshrl.u32 %v600, 30
    %v602 = vshll.u32 %v601, 30
    %v603 = vsub.s32 %v599, %v602
    %vm604 = vcmp.lt.s32.totalorder %v603, 0
    %v605 = vsub.s32 0, %v603
    %v606 = vsel %vm604, %v605, %v603
    %v607 = vclz %v606
    %v608 = vsub.s32 %v607, 2
    %vm609 = vcmp.gt.s32.totalorder 0, %v608
    %v610 = vsel %vm609, 0, %v608
    %v611 = vsub.s32 32, %v610
    %v612 = vshll.u32 %v603, %v610
    %v613 = vshrl.u32 %v595, %v611
    %v614 = vor.u32 %v612, %v613
    %v615 = vsub.s32 4294967266, %v610
    %v616 = vadd.s32 %v615, 127
    %v617 = vshll.u32 %v616, 23
    %v618 = vor.u32 4788187, %v617
    %v619 = vand.u32 2147483647, %v618
    %v621 = vcvt.s32.f32 %v614
    %v622 = vmul.f32 %v621, %v619
    %v623 = vxor.u32 %v622, 2147483648
    %v624 = vsel %vm541, %v623, %v622
    %v625 = vsub.s32 4, %v601
    %v626 = vsel %vm541, %v625, %v601
    %v627 = vsel %vm540, %v110, %v624
    %v628 = vsel %vm540, 0, %v626
    %v629 = vcosq.f32.pop %v627
    %v630 = vsinq.f32.pop %v627
    %vm631 = vweird.f32 %v110
    %v632 = vand.u32 %v628, 3
    %vm633 = vcmp.lt.s32.totalorder %v632, 2
    %vm634 = vcmp.eq.s32.totalorder %v632, 0
    %v635 = vxor.u32 %v630, 2147483648
    %v636 = vsel %vm634, %v629, %v635
    %vm637 = vcmp.eq.s32.totalorder %v632, 2
    %v638 = vxor.u32 %v629, 2147483648
    %v639 = vsel %vm637, %v638, %v630
    %v640 = vsel %vm633, %v636, %v639
    %v641 = vsel %vm631, nan, %v640
    %v642 = vand.u32 2147483647, %v111
    %vm643 = vcmp.le.f32.partialorder %v642, 0.7853982
    %vm644 = vcmp.lt.s32.totalorder %v111, 0
    %v645 = vand.u32 %v111, 2139095040
    %v646 = vshrl.u32 %v645, 23
    %v647 = vsub.s32 %v646, 127
    %v648 = vand.u32 2147483647, %v111
    %v649 = vand.u32 %v648, 8388607
    %v650 = vor.u32 %v649, 8388608
    %v651 = vsub.s32 0, %v650
    %v652 = vadd.s32 %v647, 1
    %vm653 = vcmp.gt.s32.totalorder %v652, 0
    %v654 = vsel %vm653, %v652, 0
    %v655 = vshrl.u32 %v654, 5
    %v656 = vand.u32 %v654, 31
    %v657 = vsub.s32 32, %v656
    %v658 = vshrl.u32 683565275, %v657
    %v659 = vshll.u32 683565275, %v656
    %v660 = vshrl.u32 2475754826, %v657
    %v661 = vor.u32 %v659, %v660
    %v662 = vshll.u32 2475754826, %v656
    %v663 = vshrl.u32 2131351028, %v657
    %v664 = vor.u32 %v662, %v663
    %v665 = vshll.u32 2131351028, %v656
    %v666 = vshrl.u32 2102212464, %v657
    %v667 = vor.u32 %v665, %v666
    %v668 = vshll.u32 2102212464, %v656
    %v669 = vshrl.u32 920167782, %v657
    %v670 = vor.u32 %v668, %v669
    %v671 = vshll.u32 920167782, %v656
    %v672 = vshrl.u32 1326507024, %v657
    %v673 = vor.u32 %v671, %v672
    %vm674 = vcmp.lt.s32.totalorder %v655, 1
    %vm675 = vcmp.lt.s32.totalorder %v655, 2
    %vm676 = vcmp.lt.s32.totalorder %v655, 3
    %vm677 = vcmp.lt.s32.totalorder %v655, 4
    %v678 = vsel %vm674, %v658, %v661
    %v679 = vsel %vm677, %v667, 2102212464
    %v680 = vsel %vm676, %v664, %v679
    %v681 = vsel %vm675, %v678, %v680
    %v682 = vsel %vm674, %v661, %v664
    %v683 = vsel %vm677, %v670, 920167782
    %v684 = vsel %vm676, %v667, %v683
    %v685 = vsel %vm675, %v682, %v684
    %v686 = vsel %vm674, %v664, %v667
    %v687 = vsel %vm677, %v673, 1326507024
    %v688 = vsel %vm676, %v670, %v687
    %v689 = vsel %vm675, %v686, %v688
    %v690 = vshll.u32 %v650, 8
    %v691 = vmul.u32.u64.compose %v690, %v689
    %v692 = vextract.low.u32 %v691
    %v693 = vextract.high.u32 %v691
    %v694 = vmul.u32.u64.compose %v690, %v685
    %v695 = vextract.low.u32 %v694
    %v696 = vextract.high.u32 %v694
    %v697 = vmul.u32 %v690, %v681
    %v698 = vadd.s32 %v693, %v695
    %vm699 = vc.u32 %v693, %v695
    %v700 = vadd.s32 %v696, 1
    %v701 = vsel %vm699, %v700, %v696
    %v702 = vadd.s32 %v697, %v701
    %v703 = vadd.s32 %v702, 536870912
    %v704 = vshrl.u32 %v703, 30
    %v705 = vshll.u32 %v704, 30
    %v706 = vsub.s32 %v702, %v705
    %vm707 = vcmp.lt.s32.totalorder %v706, 0
    %v708 = vsub.s32 0, %v706
    %v709 = vsel %vm707, %v708, %v706
    %v710 = vclz %v709
    %v711 = vsub.s32 %v710, 2
    %vm712 = vcmp.gt.s32.totalorder 0, %v711
    %v713 = vsel %vm712, 0, %v711
    %v714 = vsub.s32 32, %v713
    %v715 = vshll.u32 %v706, %v713
    %v716 = vshrl.u32 %v698, %v714
    %v717 = vor.u32 %v715, %v716
    %v718 = vsub.s32 4294967266, %v713
    %v719 = vadd.s32 %v718, 127
    %v720 = vshll.u32 %v719, 23
    %v721 = vor.u32 4788187, %v720
    %v722 = vand.u32 2147483647, %v721
    %v724 = vcvt.s32.f32 %v717
    %v725 = vmul.f32 %v724, %v722
    %v726 = vxor.u32 %v725, 2147483648
    %v727 = vsel %vm644, %v726, %v725
    %v728 = vsub.s32 4, %v704
    %v729 = vsel %vm644, %v728, %v704
    %v730 = vsel %vm643, %v111, %v727
    %v731 = vsel %vm643, 0, %v729
    %v732 = vcosq.f32.pop %v730
    %v733 = vsinq.f32.pop %v730
    %vm734 = vweird.f32 %v111
    %v735 = vand.u32 %v731, 3
    %vm736 = vcmp.lt.s32.totalorder %v735, 2
    %vm737 = vcmp.eq.s32.totalorder %v735, 0
    %v738 = vxor.u32 %v733, 2147483648
    %v739 = vsel %vm737, %v732, %v738
    %vm740 = vcmp.eq.s32.totalorder %v735, 2
    %v741 = vxor.u32 %v732, 2147483648
    %v742 = vsel %vm740, %v741, %v733
    %v743 = vsel %vm736, %v739, %v742
    %v744 = vsel %vm734, nan, %v743
    %v745 = vand.u32 2147483647, %v112
    %vm746 = vcmp.le.f32.partialorder %v745, 0.7853982
    %vm747 = vcmp.lt.s32.totalorder %v112, 0
    %v748 = vand.u32 %v112, 2139095040
    %v749 = vshrl.u32 %v748, 23
    %v750 = vsub.s32 %v749, 127
    %v751 = vand.u32 2147483647, %v112
    %v752 = vand.u32 %v751, 8388607
    %v753 = vor.u32 %v752, 8388608
    %v754 = vsub.s32 0, %v753
    %v755 = vadd.s32 %v750, 1
    %vm756 = vcmp.gt.s32.totalorder %v755, 0
    %v757 = vsel %vm756, %v755, 0
    %v758 = vshrl.u32 %v757, 5
    %v759 = vand.u32 %v757, 31
    %v760 = vsub.s32 32, %v759
    %v761 = vshrl.u32 683565275, %v760
    %v762 = vshll.u32 683565275, %v759
    %v763 = vshrl.u32 2475754826, %v760
    %v764 = vor.u32 %v762, %v763
    %v765 = vshll.u32 2475754826, %v759
    %v766 = vshrl.u32 2131351028, %v760
    %v767 = vor.u32 %v765, %v766
    %v768 = vshll.u32 2131351028, %v759
    %v769 = vshrl.u32 2102212464, %v760
    %v770 = vor.u32 %v768, %v769
    %v771 = vshll.u32 2102212464, %v759
    %v772 = vshrl.u32 920167782, %v760
    %v773 = vor.u32 %v771, %v772
    %v774 = vshll.u32 920167782, %v759
    %v775 = vshrl.u32 1326507024, %v760
    %v776 = vor.u32 %v774, %v775
    %vm777 = vcmp.lt.s32.totalorder %v758, 1
    %vm778 = vcmp.lt.s32.totalorder %v758, 2
    %vm779 = vcmp.lt.s32.totalorder %v758, 3
    %vm780 = vcmp.lt.s32.totalorder %v758, 4
    %v781 = vsel %vm777, %v761, %v764
    %v782 = vsel %vm780, %v770, 2102212464
    %v783 = vsel %vm779, %v767, %v782
    %v784 = vsel %vm778, %v781, %v783
    %v785 = vsel %vm777, %v764, %v767
    %v786 = vsel %vm780, %v773, 920167782
    %v787 = vsel %vm779, %v770, %v786
    %v788 = vsel %vm778, %v785, %v787
    %v789 = vsel %vm777, %v767, %v770
    %v790 = vsel %vm780, %v776, 1326507024
    %v791 = vsel %vm779, %v773, %v790
    %v792 = vsel %vm778, %v789, %v791
    %v793 = vshll.u32 %v753, 8
    %v794 = vmul.u32.u64.compose %v793, %v792
    %v795 = vextract.low.u32 %v794
    %v796 = vextract.high.u32 %v794
    %v797 = vmul.u32.u64.compose %v793, %v788
    %v798 = vextract.low.u32 %v797
    %v799 = vextract.high.u32 %v797
    %v800 = vmul.u32 %v793, %v784
    %v801 = vadd.s32 %v796, %v798
    %vm802 = vc.u32 %v796, %v798
    %v803 = vadd.s32 %v799, 1
    %v804 = vsel %vm802, %v803, %v799
    %v805 = vadd.s32 %v800, %v804
    %v806 = vadd.s32 %v805, 536870912
    %v807 = vshrl.u32 %v806, 30
    %v808 = vshll.u32 %v807, 30
    %v809 = vsub.s32 %v805, %v808
    %vm810 = vcmp.lt.s32.totalorder %v809, 0
    %v811 = vsub.s32 0, %v809
    %v812 = vsel %vm810, %v811, %v809
    %v813 = vclz %v812
    %v814 = vsub.s32 %v813, 2
    %vm815 = vcmp.gt.s32.totalorder 0, %v814
    %v816 = vsel %vm815, 0, %v814
    %v817 = vsub.s32 32, %v816
    %v818 = vshll.u32 %v809, %v816
    %v819 = vshrl.u32 %v801, %v817
    %v820 = vor.u32 %v818, %v819
    %v821 = vsub.s32 4294967266, %v816
    %v822 = vadd.s32 %v821, 127
    %v823 = vshll.u32 %v822, 23
    %v824 = vor.u32 4788187, %v823
    %v825 = vand.u32 2147483647, %v824
    %v827 = vcvt.s32.f32 %v820
    %v828 = vmul.f32 %v827, %v825
    %v829 = vxor.u32 %v828, 2147483648
    %v830 = vsel %vm747, %v829, %v828
    %v831 = vsub.s32 4, %v807
    %v832 = vsel %vm747, %v831, %v807
    %v833 = vsel %vm746, %v112, %v830
    %v834 = vsel %vm746, 0, %v832
    %v835 = vcosq.f32.pop %v833
    %v836 = vsinq.f32.pop %v833
    %vm837 = vweird.f32 %v112
    %v838 = vand.u32 %v834, 3
    %vm839 = vcmp.lt.s32.totalorder %v838, 2
    %vm840 = vcmp.eq.s32.totalorder %v838, 0
    %v841 = vxor.u32 %v836, 2147483648
    %v842 = vsel %vm840, %v835, %v841
    %vm843 = vcmp.eq.s32.totalorder %v838, 2
    %v844 = vxor.u32 %v835, 2147483648
    %v845 = vsel %vm843, %v844, %v836
    %v846 = vsel %vm839, %v842, %v845
    %v847 = vsel %vm837, nan, %v846
    %v848 = vand.u32 2147483647, %v113
    %vm849 = vcmp.le.f32.partialorder %v848, 0.7853982
    %vm850 = vcmp.lt.s32.totalorder %v113, 0
    %v851 = vand.u32 %v113, 2139095040
    %v852 = vshrl.u32 %v851, 23
    %v853 = vsub.s32 %v852, 127
    %v854 = vand.u32 2147483647, %v113
    %v855 = vand.u32 %v854, 8388607
    %v856 = vor.u32 %v855, 8388608
    %v857 = vsub.s32 0, %v856
    %v858 = vadd.s32 %v853, 1
    %vm859 = vcmp.gt.s32.totalorder %v858, 0
    %v860 = vsel %vm859, %v858, 0
    %v861 = vshrl.u32 %v860, 5
    %v862 = vand.u32 %v860, 31
    %v863 = vsub.s32 32, %v862
    %v864 = vshrl.u32 683565275, %v863
    %v865 = vshll.u32 683565275, %v862
    %v866 = vshrl.u32 2475754826, %v863
    %v867 = vor.u32 %v865, %v866
    %v868 = vshll.u32 2475754826, %v862
    %v869 = vshrl.u32 2131351028, %v863
    %v870 = vor.u32 %v868, %v869
    %v871 = vshll.u32 2131351028, %v862
    %v872 = vshrl.u32 2102212464, %v863
    %v873 = vor.u32 %v871, %v872
    %v874 = vshll.u32 2102212464, %v862
    %v875 = vshrl.u32 920167782, %v863
    %v876 = vor.u32 %v874, %v875
    %v877 = vshll.u32 920167782, %v862
    %v878 = vshrl.u32 1326507024, %v863
    %v879 = vor.u32 %v877, %v878
    %vm880 = vcmp.lt.s32.totalorder %v861, 1
    %vm881 = vcmp.lt.s32.totalorder %v861, 2
    %vm882 = vcmp.lt.s32.totalorder %v861, 3
    %vm883 = vcmp.lt.s32.totalorder %v861, 4
    %v884 = vsel %vm880, %v864, %v867
    %v885 = vsel %vm883, %v873, 2102212464
    %v886 = vsel %vm882, %v870, %v885
    %v887 = vsel %vm881, %v884, %v886
    %v888 = vsel %vm880, %v867, %v870
    %v889 = vsel %vm883, %v876, 920167782
    %v890 = vsel %vm882, %v873, %v889
    %v891 = vsel %vm881, %v888, %v890
    %v892 = vsel %vm880, %v870, %v873
    %v893 = vsel %vm883, %v879, 1326507024
    %v894 = vsel %vm882, %v876, %v893
    %v895 = vsel %vm881, %v892, %v894
    %v896 = vshll.u32 %v856, 8
    %v897 = vmul.u32.u64.compose %v896, %v895
    %v898 = vextract.low.u32 %v897
    %v899 = vextract.high.u32 %v897
    %v900 = vmul.u32.u64.compose %v896, %v891
    %v901 = vextract.low.u32 %v900
    %v902 = vextract.high.u32 %v900
    %v903 = vmul.u32 %v896, %v887
    %v904 = vadd.s32 %v899, %v901
    %vm905 = vc.u32 %v899, %v901
    %v906 = vadd.s32 %v902, 1
    %v907 = vsel %vm905, %v906, %v902
    %v908 = vadd.s32 %v903, %v907
    %v909 = vadd.s32 %v908, 536870912
    %v910 = vshrl.u32 %v909, 30
    %v911 = vshll.u32 %v910, 30
    %v912 = vsub.s32 %v908, %v911
    %vm913 = vcmp.lt.s32.totalorder %v912, 0
    %v914 = vsub.s32 0, %v912
    %v915 = vsel %vm913, %v914, %v912
    %v916 = vclz %v915
    %v917 = vsub.s32 %v916, 2
    %vm918 = vcmp.gt.s32.totalorder 0, %v917
    %v919 = vsel %vm918, 0, %v917
    %v920 = vsub.s32 32, %v919
    %v921 = vshll.u32 %v912, %v919
    %v922 = vshrl.u32 %v904, %v920
    %v923 = vor.u32 %v921, %v922
    %v924 = vsub.s32 4294967266, %v919
    %v925 = vadd.s32 %v924, 127
    %v926 = vshll.u32 %v925, 23
    %v927 = vor.u32 4788187, %v926
    %v928 = vand.u32 2147483647, %v927
    %v930 = vcvt.s32.f32 %v923
    %v931 = vmul.f32 %v930, %v928
    %v932 = vxor.u32 %v931, 2147483648
    %v933 = vsel %vm850, %v932, %v931
    %v934 = vsub.s32 4, %v910
    %v935 = vsel %vm850, %v934, %v910
    %v936 = vsel %vm849, %v113, %v933
    %v937 = vsel %vm849, 0, %v935
    %v938 = vcosq.f32.pop %v936
    %v939 = vsinq.f32.pop %v936
    %vm940 = vweird.f32 %v113
    %v941 = vand.u32 %v937, 3
    %vm942 = vcmp.lt.s32.totalorder %v941, 2
    %vm943 = vcmp.eq.s32.totalorder %v941, 0
    %v944 = vxor.u32 %v939, 2147483648
    %v945 = vsel %vm943, %v938, %v944
    %vm946 = vcmp.eq.s32.totalorder %v941, 2
    %v947 = vxor.u32 %v938, 2147483648
    %v948 = vsel %vm946, %v947, %v939
    %v949 = vsel %vm942, %v945, %v948
    %v950 = vsel %vm940, nan, %v949
    %v951 = vsel %vm122, %v226, %v641
    %v952 = vsel %vm122, %v330, %v744
    %v953 = vsel %vm122, %v434, %v847
    %v954 = vsel %vm122, %v538, %v950
    %955 = vset.pattern.permute.xlu0 1
    %956 = vperm.xlu0 %955, %v35
    %v957 = vpop.permute.xlu0 %956
    %959 = vset.pattern.permute.xlu0 1
    %960 = vperm.xlu0 %959, %v36
    %v961 = vpop.permute.xlu0 %960
    %963 = vset.pattern.permute.xlu0 1
    %964 = vperm.xlu0 %963, %v37
    %v965 = vpop.permute.xlu0 %964
    %967 = vset.pattern.permute.xlu0 1
    %968 = vperm.xlu0 %967, %v38
    %v969 = vpop.permute.xlu0 %968
    %v971 = vmul.f32 %v951, %v957
    %v972 = vmul.f32 %v952, %v961
    %v973 = vmul.f32 %v953, %v965
    %v974 = vmul.f32 %v954, %v969
    %v975 = vld [vmem:[#allocation2] sm:$0xff]
    %v976 = vld [vmem:[#allocation2 + $0x8] sm:$0xff]
    %v977 = vld [vmem:[#allocation2 + $0x10] sm:$0xff]
    %v978 = vld [vmem:[#allocation2 + $0x18] sm:$0xff]
    %v979 = vld [vmem:[#allocation2 + $0x20] sm:$0xff]
    %v980 = vld [vmem:[#allocation2 + $0x28] sm:$0xff]
    %v981 = vld [vmem:[#allocation2 + $0x30] sm:$0xff]
    %v982 = vld [vmem:[#allocation2 + $0x38] sm:$0xff]
    %v983 = vld [vmem:[%s3] sm:$0x1]
    %984 = vset.pattern.permute.xlu0 2
    %985 = vperm.xlu0 %984, %v35
    %v986 = vpop.permute.xlu0 %985
    %988 = vset.pattern.permute.xlu0 2
    %989 = vperm.xlu0 %988, %v36
    %v990 = vpop.permute.xlu0 %989
    %992 = vset.pattern.permute.xlu0 2
    %993 = vperm.xlu0 %992, %v37
    %v994 = vpop.permute.xlu0 %993
    %996 = vset.pattern.permute.xlu0 2
    %997 = vperm.xlu0 %996, %v38
    %v998 = vpop.permute.xlu0 %997
    %v1001 = vlaneseq
    %v1002 = vshrl.u32 %v1001, 7
    %v1003 = vsub.s32 0, %v1002
    %v1004 = vrot.slane %v983, %v1003
    %v1006 = vmul.f32 %v986, %v1004
    %v1007 = vmul.f32 %v990, %v1004
    %v1008 = vmul.f32 %v994, %v1004
    %v1009 = vmul.f32 %v998, %v1004
    %vm1010 = vcmask 523264
    %v1012 = vsel %vm1010, %v971, 0
    %v1015 = vsel %vm1010, %v972, 0
    %v1018 = vsel %vm1010, %v973, 0
    %v1021 = vsel %vm1010, %v974, 0
    %1023 = vmatprep.subr.mxu0 0.0
    %1024 = vmatpush1.msra.mxu0 0.0
    %1025 = vmatprep.subr.mxu0 0.0
    %1026 = vmatpush1.msra.mxu0 0.0
    %1027 = vmatprep.subr.mxu0 0.0
    %1028 = vmatpush1.msra.mxu0 0.0
    %1029 = vmatprep.subr.mxu0 0.0
    %1030 = vmatpush1.msra.mxu0 0.0
    %1031 = vmatprep.subr.mxu0 0.0
    %1032 = vmatpush1.msra.mxu0 0.0
    %1033 = vmatprep.subr.mxu0 0.0
    %1034 = vmatpush1.msra.mxu0 0.0
    %1035 = vmatprep.subr.mxu0 0.0
    %1036 = vmatpush1.msra.mxu0 0.0
    %1037 = vmatprep.subr.mxu0 0.0
    %1038 = vmatpush1.msra.mxu0 0.0
    %1039 = vmatprep.subr.mxu0 0.0
    %1040 = vmatpush1.msra.mxu0 %v982
    %1041 = vmatprep.subr.mxu0 0.0
    %1042 = vmatpush1.msra.mxu0 %v981
    %1043 = vmatprep.subr.mxu0 0.0
    %1044 = vmatpush1.msra.mxu0 %v980
    %1045 = vmatprep.subr.mxu0 0.0
    %1046 = vmatpush1.msra.mxu0 %v979
    %1047 = vmatprep.subr.mxu0 0.0
    %1048 = vmatpush1.msra.mxu0 %v978
    %1049 = vmatprep.subr.mxu0 0.0
    %1050 = vmatpush1.msra.mxu0 %v977
    %1051 = vmatprep.subr.mxu0 0.0
    %1052 = vmatpush1.msra.mxu0 %v976
    %1053 = vmatprep.subr.mxu0 0.0
    %1054 = vmatpush1.msra.mxu0 %v975
    %1055 = vmatprep.subr.mxu0 0.0
    %1056 = vmatpush2.msra.mxu0 0.0
    %1057 = vmatprep.subr.mxu0 0.0
    %1058 = vmatpush2.msra.mxu0 0.0
    %1059 = vmatprep.subr.mxu0 0.0
    %1060 = vmatpush2.msra.mxu0 0.0
    %1061 = vmatprep.subr.mxu0 0.0
    %1062 = vmatpush2.msra.mxu0 0.0
    %1063 = vmatprep.subr.mxu0 0.0
    %1064 = vmatpush2.msra.mxu0 0.0
    %1065 = vmatprep.subr.mxu0 0.0
    %1066 = vmatpush2.msra.mxu0 0.0
    %1067 = vmatprep.subr.mxu0 0.0
    %1068 = vmatpush2.msra.mxu0 0.0
    %1069 = vmatprep.subr.mxu0 0.0
    %1070 = vmatpush2.msra.mxu0 0.0
    %1071 = vmatprep.subr.mxu0 0.0
    %1072 = vmatpush2.msra.mxu0 0.0
    %1073 = vmatprep.subr.mxu0 0.0
    %1074 = vmatpush2.msra.mxu0 0.0
    %1075 = vmatprep.subr.mxu0 0.0
    %1076 = vmatpush2.msra.mxu0 0.0
    %1077 = vmatprep.subr.mxu0 0.0
    %1078 = vmatpush2.msra.mxu0 0.0
    %1079 = vmatprep.subr.mxu0 0.0
    %1080 = vmatpush2.msra.mxu0 0.0
    %1081 = vmatprep.subr.mxu0 0.0
    %1082 = vmatpush2.msra.mxu0 0.0
    %1083 = vmatprep.subr.mxu0 0.0
    %1084 = vmatpush2.msra.mxu0 0.0
    %1085 = vmatprep.subr.mxu0 0.0
    %1086 = vmatpush2.msra.mxu0 0.0
    %1087 = vmatprep.mubr.f32.mxu0 0.0
    %1088 = vmatmul.mubr.f32.gmra.mxu0 %v1012
    %v1089 = vpop.f32.mrf.mxu0
    %v1090 = vadd.f32 %v1006, %v1089
    %v1091 = vpop.f32.mrf.mxu0
    %1092 = vmatprep.mubr.f32.mxu0 0.0
    %1093 = vmatmul.mubr.f32.gmra.mxu0 %v1015
    %v1094 = vpop.f32.mrf.mxu0
    %v1095 = vadd.f32 %v1007, %v1094
    %v1096 = vpop.f32.mrf.mxu0
    %1097 = vmatprep.mubr.f32.mxu0 0.0
    %1098 = vmatmul.mubr.f32.gmra.mxu0 %v1018
    %v1099 = vpop.f32.mrf.mxu0
    %v1100 = vadd.f32 %v1008, %v1099
    %v1101 = vpop.f32.mrf.mxu0
    %1102 = vmatprep.mubr.f32.mxu0 0.0
    %1103 = vmatmul.mubr.f32.gmra.mxu0 %v1021
    %v1104 = vpop.f32.mrf.mxu0
    %v1105 = vadd.f32 %v1009, %v1104
    %v1106 = vpop.f32.mrf.mxu0
    %1107 = vdwg.mxu0
    %v1108 = vld [vmem:[%s4] sm:$0x1]
    %v1110 = vlaneseq
    %v1111 = vshrl.u32 %v1110, 7
    %v1112 = vsub.s32 0, %v1111
    %v1113 = vrot.slane %v1108, %v1112
    %v1115 = vadd.f32 %v1090, %v1113
    %v1116 = vadd.f32 %v1095, %v1113
    %v1117 = vadd.f32 %v1100, %v1113
    %v1118 = vadd.f32 %v1105, %v1113
    %1119 = vst.msk [vmem:[#allocation5] sm:$0xff] %vm1010, %v1115
    %1120 = vst.msk [vmem:[#allocation5 + $0x8] sm:$0xff] %vm1010, %v1116
    %1121 = vst.msk [vmem:[#allocation5 + $0x10] sm:$0xff] %vm1010, %v1117
    %1122 = vst.msk [vmem:[#allocation5 + $0x18] sm:$0xff] %vm1010, %v1118
    // Predicated region
    $region26: #{tpu_custom_call.1} parent=1 // pred_check
      _
    $region27: #{tpu_custom_call.1} parent=1 // pred_check_branch
      %1124 = sbr.rel (0) target = $region29
    $region28: #{tpu_custom_call.1} parent=1 // pred_region
      %s1126 = ssub.s32 512, 512
      %1127 = vsyncadd [#allocation4], %s1126
      %s1128 = sshll.u32 [#allocation5], 4
      %s1129 = int_to_ptr.vmem [resolvable:$true] %s1128
      %1134 = dma.vmem_to_hbm [thread:$0]  %s1129, 512, %s5, [#allocation4], 128, 128, 8
    $region29: #{tpu_custom_call.1} parent=1 // pred_fallthru
      _
    // Predicated region
    $region30: #{tpu_custom_call.1} parent=1 // pred_check
      _
    $region31: #{tpu_custom_call.1} parent=1 // pred_check_branch
      %1136 = sbr.rel (0) target = $region33
    $region32: #{tpu_custom_call.1} parent=1 // pred_region
      %1137 = dma.done [#allocation4], 512
    $region33: #{tpu_custom_call.1} parent=1 // pred_fallthru
      _
    %1138 = vsyncpa [#allocation3], 1
    %1139 = vsyncpa [#allocation4], 1

</llo_original>
